<compile_context>
chip_gen: v5e
topology: v5e:2x2
jax: 0.10.0
libtpu: 0.0.40
codegen_flags: <defaults>
</compile_context>

<pallas_src>
import numpy as np
import jax
import jax.numpy as jnp
from jax import lax
from jax.experimental import pallas as pl
from jax.experimental.pallas import tpu as pltpu


def _upsample1d_kernel(x_ref, fix_ref, w_ref, b_ref, o_ref):
    """One grid step: (BN, C, TL) -> (BN, C, 2*TL), NCW layout.

    x_ref  : (BN, C, TL)    input tile
    fix_ref: (BN, 1, 2, C)  halo contributions:
             [..., 0, :] = x[:, tile_start-1] @ W3  (zeros at sequence start)
             [..., 1, :] = x[:, tile_end]     @ W0  (zeros at sequence end)
    w_ref  : (C, 4C)        fused weights [W0 | W1 | W2 | W3]
    b_ref  : (1, C)         bias
    o_ref  : (BN, C, 2TL)   output tile
    """
    BN, C, TL = x_ref.shape
    w = w_ref[...]                                        # hoisted (loop-invariant)
    bias = b_ref[...].astype(jnp.float32)                 # (1, C)
    row = lax.broadcasted_iota(jnp.int32, (TL, 1), 0)     # tiny (TL, 1) mask source

    def per_row(b, carry):
        # NCW -> (time, channel) in-VMEM (no HBM round trip).
        x_lc = jnp.transpose(x_ref[b]).astype(w.dtype)                 # (TL, C)
        # Single fused MXU matmul for all four taps; f32 accumulation; M = TL.
        p = jnp.dot(x_lc, w, preferred_element_type=jnp.float32)       # (TL, 4C)
        p0 = p[:, 0:C]
        p1 = p[:, C:2 * C]
        p2 = p[:, 2 * C:3 * C]
        p3 = p[:, 3 * C:4 * C]

        # +-1 time-step shift via sublane roll + halo fix-up at tile boundary.
        fix_l = fix_ref[b, 0, 0:1, :].astype(jnp.float32)              # (1, C)
        fix_r = fix_ref[b, 0, 1:2, :].astype(jnp.float32)              # (1, C)
        p3_prev = jnp.where(row == 0, fix_l,
                            pltpu.roll(p3, shift=1, axis=0))
        p0_next = jnp.where(row == TL - 1, fix_r,
                            pltpu.roll(p0, shift=TL - 1, axis=0))      # == shift -1

        y_even = p1 + p3_prev + bias                                   # output cols 2m
        y_odd = p2 + p0_next + bias                                    # output cols 2m+1

        # Sublane interleave even/odd rows, then store lane-dense in NCW.
        y = jnp.stack([y_even, y_odd], axis=1).reshape(2 * TL, C)
        o_ref[b] = jnp.transpose(y).astype(o_ref.dtype)
        return carry

    lax.fori_loop(0, BN, per_row, 0)


def _vmem_limit_bytes():
    """Scoped-VMEM limit: ~75% of physical, clamped to [32 MiB, 100 MiB].
    v5e/v6e (128 MiB phys) -> 96 MiB; v7x (64 MiB phys) -> 48 MiB."""
    try:
        phys = int(pltpu.get_tpu_info().vmem_capacity_bytes)
    except Exception:
        phys = 64 << 20
    return int(max(32 << 20, min(phys * 3 // 4, 100 << 20)))


def _choose_tiling(N, C, L, itemsize, vmem_limit):
    """Pick (BN, TL): BN batch rows x TL time steps per grid step.

    Goals: large per-step DMAs (HBM-bound op), fit double-buffered in/out
    blocks + f32 temporaries + weights in the scoped VMEM limit, and keep
    >= 2 grid points when possible (both v7x TensorCores)."""
    weights_bytes = 4 * C * C * 4 + 4 * C
    budget = max(2 << 20, int(vmem_limit * 0.55) - weights_bytes)

    def step_bytes(bn, tl):
        io = 2 * bn * (C * tl + 2 * C * tl) * itemsize   # double-buffered x & out blocks
        temps = 14 * C * tl * 4                          # per-row f32 intermediates
        return io + temps

    tl_target = 4096 if C <= 128 else (2048 if C <= 512 else 1024)
    tl = L if L <= tl_target else (tl_target // 128) * 128
    while tl > 128 and step_bytes(1, tl) > budget:
        tl = max(128, (tl // 2) // 128 * 128)            # stay a multiple of 128
    t = -(-L // tl)

    bn = 1
    for cand in range(1, min(N, 8) + 1):
        if N % cand:
            continue
        if step_bytes(cand, tl) > budget:
            break
        if t == 1 and N > 1 and N // cand < 2:
            break                                        # keep >= 2 grid points
        bn = cand
        if cand * C * tl * itemsize >= (2 << 20):
            break                                        # step DMA already large
    return bn, tl


def upsample1d(x_ncw, weight, bias, *, tile_l=None, block_n=None, compute_dtype=None):
    """ConvTranspose1d(dim, dim, 4, 2, 1) forward.

    x_ncw:  (N, C, L)  PyTorch NCW layout.
    weight: (C_in=C, C_out=C, 4)  PyTorch ConvTranspose1d weight.
    bias:   (C,)
    tile_l: optional explicit L-tile (use a multiple of 128 if it must split L).
    block_n: optional explicit batch rows per grid step (must divide N).
    compute_dtype: optional matmul operand dtype (e.g. jnp.bfloat16 on v6e/v7x);
                   accumulation and epilogue stay f32.  Default = exact f32.
    Returns (N, C, 2L) in NCW layout.
    """
    N, C, L = x_ncw.shape
    assert weight.shape == (C, C, 4) and bias.shape == (C,)
    itemsize = jnp.dtype(x_ncw.dtype).itemsize

    vmem_limit = _vmem_limit_bytes()
    if tile_l is None and block_n is None:
        BN, TL = _choose_tiling(N, C, L, itemsize, vmem_limit)
    else:
        TL = tile_l if tile_l is not None else min(L, 4096)
        BN = block_n if block_n is not None else 1
    assert N % BN == 0, f"block_n={BN} must divide N={N}"

    T = -(-L // TL)                      # number of L tiles
    L_pad = T * TL
    x_pad = x_ncw if L_pad == L else jnp.pad(x_ncw, ((0, 0), (0, 0), (0, L_pad - L)))

    # Fused weight (C, 4C) = [W0 | W1 | W2 | W3]; built once in the wrapper.
    w_cat = jnp.concatenate([weight[:, :, k] for k in range(4)], axis=1)
    if compute_dtype is not None:
        w_cat = w_cat.astype(compute_dtype)
    b_2d = bias.reshape(1, C).astype(jnp.float32)

    # Halo contributions, merged into one array (one small DMA per step):
    #   fixes[n, t, 0, :] = x[n, :, t*TL-1]   @ W3   (zeros for t == 0)
    #   fixes[n, t, 1, :] = x[n, :, (t+1)*TL] @ W0   (zeros for t == T-1)
    fixes = jnp.zeros((N, T, 2, C), jnp.float32)
    if T > 1:
        xl_cols = x_pad[:, :, TL - 1:L_pad - 1:TL].astype(jnp.float32)   # (N, C, T-1)
        xr_cols = x_pad[:, :, TL:L_pad:TL].astype(jnp.float32)           # (N, C, T-1)
        fixes = fixes.at[:, 1:, 0, :].set(
            jnp.einsum("nct,co->nto", xl_cols, weight[:, :, 3].astype(jnp.float32)))
        fixes = fixes.at[:, :-1, 1, :].set(
            jnp.einsum("nct,co->nto", xr_cols, weight[:, :, 0].astype(jnp.float32)))

    # Single-buffer the (constant-index) weights once they are big enough to matter.
    w_spec_kwargs = {}
    if C >= 128:
        w_spec_kwargs["pipeline_mode"] = pl.Buffered(1)
    w_spec = pl.BlockSpec((C, 4 * C), lambda nb, t: (0, 0), **w_spec_kwargs)

    flops = 2 * N * L_pad * C * 4 * C
    w_bytes = int(w_cat.size) * jnp.dtype(w_cat.dtype).itemsize
    bytes_accessed = 3 * N * C * L_pad * itemsize + w_bytes + int(fixes.size) * 4

    out = pl.pallas_call(
        _upsample1d_kernel,
        out_shape=jax.ShapeDtypeStruct((N, C, 2 * L_pad), x_ncw.dtype),
        grid_spec=pltpu.PrefetchScalarGridSpec(
            num_scalar_prefetch=0,
            grid=(N // BN, T),
            in_specs=[
                pl.BlockSpec((BN, C, TL), lambda nb, t: (nb, 0, t)),       # x tile (NCW)
                pl.BlockSpec((BN, 1, 2, C), lambda nb, t: (nb, t, 0, 0)),  # halo fix-ups
                w_spec,                                                     # fused weights
                pl.BlockSpec((1, C), lambda nb, t: (0, 0)),                 # bias
            ],
            out_specs=pl.BlockSpec((BN, C, 2 * TL), lambda nb, t: (nb, 0, t)),
        ),
        compiler_params=pltpu.CompilerParams(
            # No cross-tile accumulation: both axes shard across TensorCores.
            dimension_semantics=("parallel", "parallel"),
            vmem_limit_bytes=vmem_limit,
        ),
        cost_estimate=pl.CostEstimate(
            flops=flops, transcendentals=0, bytes_accessed=bytes_accessed),
    )(x_pad, fixes, w_cat, b_2d)

    return out if L_pad == L else out[:, :, :2 * L]


def _reference_conv_transpose1d(x, w, b):
    """Direct NumPy reference of nn.ConvTranspose1d(dim, dim, 4, 2, 1)."""
    N, C_in, L = x.shape
    _, C_out, K = w.shape
    stride, pad = 2, 1
    out_len = (L - 1) * stride - 2 * pad + K
    y = np.zeros((N, C_out, out_len), dtype=np.float64)
    for l in range(L):
        for k in range(K):
            t = l * stride - pad + k
            if 0 <= t < out_len:
                y[:, :, t] += np.einsum("ni,io->no", x[:, :, l], w[:, :, k])
    y += b[None, :, None]
    return y.astype(np.float32)


if __name__ == "__main__":
    root_key = jax.random.PRNGKey(0)

    def run_case(case_idx, N, C, L, **kw):
        kx, kw_, kb = jax.random.split(jax.random.fold_in(root_key, case_idx), 3)
        x = jax.random.normal(kx, (N, C, L), dtype=jnp.float32)
        bound = 1.0 / np.sqrt(C * 4)
        weight = jax.random.uniform(kw_, (C, C, 4), dtype=jnp.float32,
                                    minval=-bound, maxval=bound)
        bias = jax.random.uniform(kb, (C,), dtype=jnp.float32,
                                  minval=-bound, maxval=bound)

        out = jax.block_until_ready(upsample1d(x, weight, bias, **kw))
        ref = _reference_conv_transpose1d(np.asarray(x), np.asarray(weight),
                                          np.asarray(bias))
        np.testing.assert_allclose(np.asarray(out), ref, rtol=1e-5, atol=1e-5)

    # Small shapes: dim (channels) = 8.
    run_case(0, N=2, C=8, L=16)                                   # auto tiling, single tile
    run_case(1, N=1, C=8, L=256, tile_l=128)                      # L tiling + halo fix-up path
    run_case(2, N=2, C=8, L=200, tile_l=128, block_n=2)           # ragged L (padding) + batch blocking

    print("KERNEL_OK")
</pallas_src>

<mosaic_0001>
module attributes {stable_mosaic.version = 11 : i64} {
  func.func @_upsample1d_kernel(%arg0: i32, %arg1: i32, %arg2: memref<1x8x16xf32, #tpu.memory_space<vmem>>, %arg3: memref<1x1x2x8xf32, #tpu.memory_space<vmem>>, %arg4: memref<8x32xf32, #tpu.memory_space<vmem>>, %arg5: memref<1x8xf32, #tpu.memory_space<vmem>>, %arg6: memref<1x8x32xf32, #tpu.memory_space<vmem>>) attributes {dimension_semantics = [#tpu.dimension_semantics<parallel>, #tpu.dimension_semantics<parallel>], iteration_bounds = array<i64: 2, 1>, scalar_prefetch = 0 : i64, scratch_operands = 0 : i64, tpu.core_type = #tpu.core_type<tc>, window_params = [{transform_indices = @transform_0, window_bounds = array<i64: 1, 8, 16>}, {transform_indices = @transform_1, window_bounds = array<i64: 1, 1, 2, 8>}, {pipeline_mode = #tpu.pipeline_mode<synchronous>, transform_indices = @transform_2, window_bounds = array<i64: 8, 32>}, {pipeline_mode = #tpu.pipeline_mode<synchronous>, transform_indices = @transform_3, window_bounds = array<i64: 1, 8>}, {transform_indices = @transform_4, window_bounds = array<i64: 1, 8, 32>}]} {
    %c0 = arith.constant 0 : index
    %c0_0 = arith.constant 0 : index
    %0 = vector.load %arg4[%c0, %c0_0] : memref<8x32xf32, #tpu.memory_space<vmem>>, vector<8x32xf32>
    %c0_1 = arith.constant 0 : index
    %c0_2 = arith.constant 0 : index
    %1 = vector.load %arg5[%c0_1, %c0_2] : memref<1x8xf32, #tpu.memory_space<vmem>>, vector<1x8xf32>
    %2 = tpu.iota {dimensions = array<i32: 0>} : vector<16x1xi32>
    %c0_i32 = arith.constant 0 : i32
    %3 = arith.index_cast %c0_i32 : i32 to index
    %c0_3 = arith.constant 0 : index
    %c0_4 = arith.constant 0 : index
    %4 = vector.load %arg2[%3, %c0_3, %c0_4] : memref<1x8x16xf32, #tpu.memory_space<vmem>>, vector<1x8x16xf32>
    %5 = vector.shape_cast %4 : vector<1x8x16xf32> to vector<8x16xf32>
    %6 = tpu.transpose %5, [1, 0] : vector<8x16xf32> -> vector<16x8xf32>
    %cst = arith.constant dense<0.000000e+00> : vector<16x32xf32>
    %7 = tpu.matmul %6, %0, %cst {dimension_numbers = #tpu.dot_dimension_numbers<[1], [0], [0], [1], [0, 0, 1, 1], [], []>} : vector<16x8xf32>, vector<8x32xf32>, vector<16x32xf32> -> vector<16x32xf32>
    %8 = vector.extract_strided_slice %7 {offsets = [0, 0], sizes = [16, 8], strides = [1, 1]} : vector<16x32xf32> to vector<16x8xf32>
    %9 = vector.extract_strided_slice %7 {offsets = [0, 8], sizes = [16, 8], strides = [1, 1]} : vector<16x32xf32> to vector<16x8xf32>
    %10 = vector.extract_strided_slice %7 {offsets = [0, 16], sizes = [16, 8], strides = [1, 1]} : vector<16x32xf32> to vector<16x8xf32>
    %11 = vector.extract_strided_slice %7 {offsets = [0, 24], sizes = [16, 8], strides = [1, 1]} : vector<16x32xf32> to vector<16x8xf32>
    %12 = arith.index_cast %c0_i32 : i32 to index
    %c0_5 = arith.constant 0 : index
    %c0_6 = arith.constant 0 : index
    %c0_7 = arith.constant 0 : index
    %13 = vector.load %arg3[%12, %c0_5, %c0_6, %c0_7] : memref<1x1x2x8xf32, #tpu.memory_space<vmem>>, vector<1x1x1x8xf32>
    %14 = vector.shape_cast %13 : vector<1x1x1x8xf32> to vector<1x8xf32>
    %15 = arith.index_cast %c0_i32 : i32 to index
    %c0_8 = arith.constant 0 : index
    %c1 = arith.constant 1 : index
    %c0_9 = arith.constant 0 : index
    %16 = vector.load %arg3[%15, %c0_8, %c1, %c0_9] : memref<1x1x2x8xf32, #tpu.memory_space<vmem>>, vector<1x1x1x8xf32>
    %17 = vector.shape_cast %16 : vector<1x1x1x8xf32> to vector<1x8xf32>
    %c0_i32_10 = arith.constant 0 : i32
    %18 = vector.broadcast %c0_i32_10 : i32 to vector<16x1xi32>
    %19 = arith.cmpi eq, %2, %18 : vector<16x1xi32>
    %c1_i32 = arith.constant 1 : i32
    %20 = tpu.dynamic_rotate %11 by %c1_i32 dim 0 : vector<16x8xf32>, i32 -> vector<16x8xf32>
    %21 = vector.shape_cast %19 : vector<16x1xi1> to vector<16x1xi1>
    %22 = vector.broadcast %21 : vector<16x1xi1> to vector<16x8xi1>
    %23 = vector.shape_cast %14 : vector<1x8xf32> to vector<1x8xf32>
    %24 = vector.broadcast %23 : vector<1x8xf32> to vector<16x8xf32>
    %25 = arith.select %22, %24, %20 : vector<16x8xi1>, vector<16x8xf32>
    %c15_i32 = arith.constant 15 : i32
    %26 = vector.broadcast %c15_i32 : i32 to vector<16x1xi32>
    %27 = arith.cmpi eq, %2, %26 : vector<16x1xi32>
    %c15_i32_11 = arith.constant 15 : i32
    %28 = tpu.dynamic_rotate %8 by %c15_i32_11 dim 0 : vector<16x8xf32>, i32 -> vector<16x8xf32>
    %29 = vector.shape_cast %27 : vector<16x1xi1> to vector<16x1xi1>
    %30 = vector.broadcast %29 : vector<16x1xi1> to vector<16x8xi1>
    %31 = vector.shape_cast %17 : vector<1x8xf32> to vector<1x8xf32>
    %32 = vector.broadcast %31 : vector<1x8xf32> to vector<16x8xf32>
    %33 = arith.select %30, %32, %28 : vector<16x8xi1>, vector<16x8xf32>
    %34 = arith.addf %9, %25 : vector<16x8xf32>
    %35 = vector.broadcast %1 : vector<1x8xf32> to vector<16x8xf32>
    %36 = arith.addf %34, %35 : vector<16x8xf32>
    %37 = arith.addf %10, %33 : vector<16x8xf32>
    %38 = vector.broadcast %1 : vector<1x8xf32> to vector<16x8xf32>
    %39 = arith.addf %37, %38 : vector<16x8xf32>
    %40 = vector.shape_cast %36 : vector<16x8xf32> to vector<16x1x8xf32>
    %41 = vector.shape_cast %39 : vector<16x8xf32> to vector<16x1x8xf32>
    %42 = tpu.concatenate %40, %41 in 1 : vector<16x1x8xf32>, vector<16x1x8xf32> -> vector<16x2x8xf32>
    %43 = vector.shape_cast %42 : vector<16x2x8xf32> to vector<32x8xf32>
    %44 = tpu.transpose %43, [1, 0] : vector<32x8xf32> -> vector<8x32xf32>
    %45 = arith.index_cast %c0_i32 : i32 to index
    %c0_12 = arith.constant 0 : index
    %c0_13 = arith.constant 0 : index
    %46 = vector.load %arg6[%45, %c0_12, %c0_13] : memref<1x8x32xf32, #tpu.memory_space<vmem>>, vector<1x8x32xf32>
    %47 = vector.shape_cast %46 : vector<1x8x32xf32> to vector<8x32xf32>
    %48 = vector.shape_cast %44 : vector<8x32xf32> to vector<1x8x32xf32>
    tpu.vector_store %arg6[%45, %c0_12, %c0_13], %48 {strides = array<i32>} : memref<1x8x32xf32, #tpu.memory_space<vmem>>, vector<1x8x32xf32>,
    %c1_i32_14 = arith.constant 1 : i32
    return
  }
  func.func @transform_0(%arg0: i32, %arg1: i32) -> (i32, i32, i32) {
    %c0_i32 = arith.constant 0 : i32
    %c0_i32_0 = arith.constant 0 : i32
    return %arg0, %c0_i32, %arg1 : i32, i32, i32
  }
  func.func @transform_1(%arg0: i32, %arg1: i32) -> (i32, i32, i32, i32) {
    %c0_i32 = arith.constant 0 : i32
    %c0_i32_0 = arith.constant 0 : i32
    %c0_i32_1 = arith.constant 0 : i32
    return %arg0, %arg1, %c0_i32, %c0_i32_0 : i32, i32, i32, i32
  }
  func.func @transform_2(%arg0: i32, %arg1: i32) -> (i32, i32) {
    %c0_i32 = arith.constant 0 : i32
    %c0_i32_0 = arith.constant 0 : i32
    %c0_i32_1 = arith.constant 0 : i32
    return %c0_i32, %c0_i32_0 : i32, i32
  }
  func.func @transform_3(%arg0: i32, %arg1: i32) -> (i32, i32) {
    %c0_i32 = arith.constant 0 : i32
    %c0_i32_0 = arith.constant 0 : i32
    %c0_i32_1 = arith.constant 0 : i32
    return %c0_i32, %c0_i32_0 : i32, i32
  }
  func.func @transform_4(%arg0: i32, %arg1: i32) -> (i32, i32, i32) {
    %c0_i32 = arith.constant 0 : i32
    %c0_i32_0 = arith.constant 0 : i32
    return %arg0, %c0_i32, %arg1 : i32, i32, i32
  }
}

</mosaic_0001>

<llo_original>
// kernel: tpu_custom_call.1
$region0: #{tpu_custom_call.1}
  #allocation0 [shape = 'u32[]', space=smem, size = 0x4, offset = 0x4, fixed_abs, tag = 'smem constant byte address 0x4 - core index']
  #allocation1 [shape = 'u32[72,128]{1,0:T(1,128)}', space=vmem, size = 0x9000, scoped, tag = 'internal scratch']
  %s0 = inlined_call_operand.hbm [shape: f32[2,8,16], index: 0, kind: input, shape index: {}]
  %s1 = inlined_call_operand.hbm [shape: f32[2,1,2,8], index: 1, kind: input, shape index: {}]
  %s2 = inlined_call_operand.hbm [shape: f32[8,32], index: 2, kind: input, shape index: {}]
  %s3 = inlined_call_operand.vmem [shape: f32[1,8], index: 3, kind: input, shape index: {}]
  %s4 = inlined_call_operand.hbm [shape: f32[2,8,32], index: 4, kind: output, shape index: {}]
  %s5 = sld [smem:[#allocation0]]
  $region61: #{tpu_custom_call.1} parent=0
    _
  %s7 = ssub.s32 1, %s5
  %s8 = scalar_select 0, %s7, %s5
  $region1: #{tpu_custom_call.1} parent=0
    #allocation2 [shape = 'u8[8192]{0}', space=vmem, size = 0x2000, scoped, tag = 'input window, operand 0']
    #allocation3 [shape = 's32[2]{0}', space=sflag, size = 0x8, scoped, tag = 'scoped memory for tpu_custom_call.1']
    #allocation4 [shape = 's32[2]{0}', space=sflag, size = 0x8, scoped, tag = 'scoped memory for tpu_custom_call.1']
    #allocation5 [shape = 'u8[2048]{0}', space=vmem, size = 0x800, scoped, tag = 'input window, operand 1']
    #allocation6 [shape = 's32[2]{0}', space=sflag, size = 0x8, scoped, tag = 'scoped memory for tpu_custom_call.1']
    #allocation7 [shape = 'u8[4096]{0}', space=vmem, size = 0x1000, scoped, tag = 'input window, operand 2, single buffered']
    #allocation8 [shape = 'u8[8192]{0}', space=vmem, size = 0x2000, scoped, tag = 'output window, operand 0']
    %9 = vsyncpa [#allocation3], 0
    %s10 = scalar_lea.sflag [#allocation3], 1
    %11 = vsyncpa %s10, 0
    %12 = vsyncpa [#allocation6], 0
    %s13 = scalar_lea.sflag [#allocation6], 1
    %14 = vsyncpa %s13, 0
    %15 = vsyncpa [#allocation4], 0
    %s16 = scalar_lea.sflag [#allocation4], 1
    %17 = vsyncpa %s16, 0
    loop: start=0, step=1, limit=4
    $region2: #{tpu_custom_call.1} parent=1 // loop_pre_header
      _
    $region3: #{tpu_custom_call.1} parent=1 // loop_header
      %s19 = sphi 0, %s23
      %p20 = scmp.ge.s32.totalorder %s19, 4
      %s26 = sphi 0, %s38
      %s27 = sphi 0, %s34
      %s28 = sphi 0, %s26
      %s29 = sphi 0, %s27
      %s30 = sphi 0, %s28
      %s31 = sphi 0, %s29
      %s43 = sphi 0, %s45
      %s46 = sphi 0, %s43
      %s47 = sphi 0, %s46
      %s63 = sphi 0, %s47
      %s71 = sphi 0, %s73
      %s74 = sphi 0, %s71
      %s75 = sphi 0, %s74
      %s91 = sphi 0, %s75
      %s95 = sphi 0, %s95
      %s97 = sphi 0, %s95
      %s98 = sphi 0, %s97
      %s112 = sphi 0, %s98
      %s116 = sphi 0, %s116
      %s118 = sphi 0, %s116
      %s119 = sphi 0, %s118
      %s133 = sphi 0, %s119
      %s141 = sphi 0, %s143
      %s144 = sphi 0, %s141
      %s145 = sphi 0, %s144
      %s161 = sphi 0, %s145
    $region4: #{tpu_custom_call.1} parent=1 // loop_header_branch
      %22 = sbr.rel (%p20) target = $region8
    $region5: #{tpu_custom_call.1} parent=1 // loop_body
      %s24 = ssub.s32 %s19, 1
      %s25 = ssub.s32 %s19, 2
      %s32 = sadd.s32 1, %s27
      %p33 = scmp.ge.s32.totalorder %s32, 1
      %s34 = scalar_select %p33, 0, %s32
      %s35 = sadd.s32 1, %s26
      %s36 = scalar_select %p33, %s35, %s26
      %p37 = scmp.ge.s32.totalorder %s36, 2
      %s38 = scalar_select %p37, 0, %s36
      %s39 = ssub.s32 %s26, %s38
      %s40 = ssub.s32 %s27, %s34
      %s41 = sor.u32 %s39, %s40
      %p42 = scmp.eq.s32.totalorder %s41, 0
      %s44 = sadd.s32 %s43, 1
      %s45 = scalar_select %p42, %s43, %s44
      %p48 = pneg %p42
      %p49 = scmp.eq.s32.totalorder %s19, 1
      %p50 = por %p48, %p49
      %p51 = scmp.ne.s32.totalorder %s43, %s46
      %p52 = scmp.eq.s32.totalorder %s19, 0
      %p53 = por %p51, %p52
      %p54 = scmp.ne.s32.totalorder %s43, %s46
      %p55 = scmp.eq.s32.totalorder %s24, 1
      %p56 = por %p54, %p55
      %p57 = scmp.ne.s32.totalorder %s46, %s47
      %p58 = scmp.eq.s32.totalorder %s24, 0
      %p59 = por %p57, %p58
      %p60 = scmp.ne.s32.totalorder %s46, %s47
      %p61 = scmp.eq.s32.totalorder %s25, 1
      %p62 = por %p60, %p61
      %p64 = scmp.ne.s32.totalorder %s47, %s63
      %p65 = scmp.eq.s32.totalorder %s25, 0
      %p66 = por %p64, %p65
      %s67 = ssub.s32 %s26, %s38
      %s68 = ssub.s32 %s27, %s34
      %s69 = sor.u32 %s67, %s68
      %p70 = scmp.eq.s32.totalorder %s69, 0
      %s72 = sadd.s32 %s71, 1
      %s73 = scalar_select %p70, %s71, %s72
      %p76 = pneg %p70
      %p77 = scmp.eq.s32.totalorder %s19, 1
      %p78 = por %p76, %p77
      %p79 = scmp.ne.s32.totalorder %s71, %s74
      %p80 = scmp.eq.s32.totalorder %s19, 0
      %p81 = por %p79, %p80
      %p82 = scmp.ne.s32.totalorder %s71, %s74
      %p83 = scmp.eq.s32.totalorder %s24, 1
      %p84 = por %p82, %p83
      %p85 = scmp.ne.s32.totalorder %s74, %s75
      %p86 = scmp.eq.s32.totalorder %s24, 0
      %p87 = por %p85, %p86
      %p88 = scmp.ne.s32.totalorder %s74, %s75
      %p89 = scmp.eq.s32.totalorder %s25, 1
      %p90 = por %p88, %p89
      %p92 = scmp.ne.s32.totalorder %s75, %s91
      %p93 = scmp.eq.s32.totalorder %s25, 0
      %p94 = por %p92, %p93
      %s96 = sadd.s32 %s95, 1
      %p99 = scmp.eq.s32.totalorder %s19, 1
      %p100 = scmp.ne.s32.totalorder %s95, %s97
      %p101 = scmp.eq.s32.totalorder %s19, 0
      %p102 = por %p100, %p101
      %p103 = scmp.ne.s32.totalorder %s95, %s97
      %p104 = scmp.eq.s32.totalorder %s24, 1
      %p105 = por %p103, %p104
      %p106 = scmp.ne.s32.totalorder %s97, %s98
      %p107 = scmp.eq.s32.totalorder %s24, 0
      %p108 = por %p106, %p107
      %p109 = scmp.ne.s32.totalorder %s97, %s98
      %p110 = scmp.eq.s32.totalorder %s25, 1
      %p111 = por %p109, %p110
      %p113 = scmp.ne.s32.totalorder %s98, %s112
      %p114 = scmp.eq.s32.totalorder %s25, 0
      %p115 = por %p113, %p114
      %s117 = sadd.s32 %s116, 1
      %p120 = scmp.eq.s32.totalorder %s19, 1
      %p121 = scmp.ne.s32.totalorder %s116, %s118
      %p122 = scmp.eq.s32.totalorder %s19, 0
      %p123 = por %p121, %p122
      %p124 = scmp.ne.s32.totalorder %s116, %s118
      %p125 = scmp.eq.s32.totalorder %s24, 1
      %p126 = por %p124, %p125
      %p127 = scmp.ne.s32.totalorder %s118, %s119
      %p128 = scmp.eq.s32.totalorder %s24, 0
      %p129 = por %p127, %p128
      %p130 = scmp.ne.s32.totalorder %s118, %s119
      %p131 = scmp.eq.s32.totalorder %s25, 1
      %p132 = por %p130, %p131
      %p134 = scmp.ne.s32.totalorder %s119, %s133
      %p135 = scmp.eq.s32.totalorder %s25, 0
      %p136 = por %p134, %p135
      %s137 = ssub.s32 %s26, %s38
      %s138 = ssub.s32 %s27, %s34
      %s139 = sor.u32 %s137, %s138
      %p140 = scmp.eq.s32.totalorder %s139, 0
      %s142 = sadd.s32 %s141, 1
      %s143 = scalar_select %p140, %s141, %s142
      %p146 = pneg %p140
      %p147 = scmp.eq.s32.totalorder %s19, 1
      %p148 = por %p146, %p147
      %p149 = scmp.ne.s32.totalorder %s141, %s144
      %p150 = scmp.eq.s32.totalorder %s19, 0
      %p151 = por %p149, %p150
      %p152 = scmp.ne.s32.totalorder %s141, %s144
      %p153 = scmp.eq.s32.totalorder %s24, 1
      %p154 = por %p152, %p153
      %p155 = scmp.ne.s32.totalorder %s144, %s145
      %p156 = scmp.eq.s32.totalorder %s24, 0
      %p157 = por %p155, %p156
      %p158 = scmp.ne.s32.totalorder %s144, %s145
      %p159 = scmp.eq.s32.totalorder %s25, 1
      %p160 = por %p158, %p159
      %p162 = scmp.ne.s32.totalorder %s145, %s161
      %p163 = scmp.eq.s32.totalorder %s25, 0
      %p164 = por %p162, %p163
      %p165 = scmp.le.s32.totalorder 1, %s19
      %p166 = scmp.lt.s32.totalorder %s19, 3
      %p167 = pnand %p165, %p166
      %p168 = pneg %p167
      // Predicated region
      $region9: #{tpu_custom_call.1} parent=5 // pred_check
        _
      $region10: #{tpu_custom_call.1} parent=5 // pred_check_branch
        %170 = sbr.rel (%p167) target = $region12
      $region11: #{tpu_custom_call.1} parent=5 // pred_region
        %s171 = ssub.s32 %s19, 1
        // Predicated region
        $region13: #{tpu_custom_call.1} parent=11 // pred_check
          %p172 = pneg %p108
        $region14: #{tpu_custom_call.1} parent=11 // pred_check_branch
          %174 = sbr.rel (%p172) target = $region16
        $region15: #{tpu_custom_call.1} parent=11 // pred_region
          %176 = vsyncadd [#allocation6], 0
          %s178 = sshll.u32 %s2, 4
          %s179 = int_to_ptr.hbm [resolvable:$true] %s178
          %s180 = sshll.u32 [#allocation7], 4
          %s181 = int_to_ptr.vmem [resolvable:$true] %s180
          %183 = dma.hbm_to_vmem [thread:$0]  %s179, 128, %s181, [#allocation6]
        $region16: #{tpu_custom_call.1} parent=11 // pred_fallthru
          _
        // Predicated region
        $region17: #{tpu_custom_call.1} parent=11 // pred_check
          %p184 = pneg %p129
        $region18: #{tpu_custom_call.1} parent=11 // pred_check_branch
          %186 = sbr.rel (%p184) target = $region20
        $region19: #{tpu_custom_call.1} parent=11 // pred_region
          _
        $region20: #{tpu_custom_call.1} parent=11 // pred_fallthru
          _
      $region12: #{tpu_custom_call.1} parent=5 // pred_fallthru
        _
      %p187 = scmp.lt.s32.totalorder %s19, 2
      // Predicated region
      $region21: #{tpu_custom_call.1} parent=5 // pred_check
        %p188 = pneg %p187
      $region22: #{tpu_custom_call.1} parent=5 // pred_check_branch
        %190 = sbr.rel (%p188) target = $region24
      $region23: #{tpu_custom_call.1} parent=5 // pred_region
        // Predicated region
        $region25: #{tpu_custom_call.1} parent=23 // pred_check
          %p191 = pneg %p53
        $region26: #{tpu_custom_call.1} parent=23 // pred_check_branch
          %193 = sbr.rel (%p191) target = $region28
        $region27: #{tpu_custom_call.1} parent=23 // pred_region
          %s194 = sand.u32 %s43, 1
          %s195 = scalar_lea.sflag [#allocation3], %s194
          %s196 = sand.u32 %s43, 1
          %s197 = smul.addr %s196, 8
          %s198 = scalar_lea.vmem [#allocation2], %s197
          %200 = vsyncadd %s195, 0
          %s201 = sadd.s32 %s27, %s26
          %s202 = smul.addr %s201, 8
          %s203 = scalar_lea.hbm %s0, %s202
          %s205 = sshll.u32 %s203, 4
          %s206 = int_to_ptr.hbm [resolvable:$true] %s205
          %s207 = sshll.u32 %s198, 4
          %s208 = int_to_ptr.vmem [resolvable:$true] %s207
          %210 = dma.hbm_to_vmem [thread:$0]  %s206, 128, %s208, %s195
        $region28: #{tpu_custom_call.1} parent=23 // pred_fallthru
          _
        // Predicated region
        $region29: #{tpu_custom_call.1} parent=23 // pred_check
          %p211 = pneg %p81
        $region30: #{tpu_custom_call.1} parent=23 // pred_check_branch
          %213 = sbr.rel (%p211) target = $region32
        $region31: #{tpu_custom_call.1} parent=23 // pred_region
          %s214 = sand.u32 %s19, 1
          %s215 = scalar_lea.sflag [#allocation6], %s214
          %s216 = sand.u32 %s71, 1
          %s217 = smul.addr %s216, 2
          %s218 = scalar_lea.vmem [#allocation5], %s217
          %220 = vsyncadd %s215, 0
          %s221 = sadd.s32 %s27, %s26
          %s222 = smul.addr %s221, 2
          %s223 = scalar_lea.hbm %s1, %s222
          %s225 = sshll.u32 %s223, 4
          %s226 = int_to_ptr.hbm [resolvable:$true] %s225
          %s227 = sshll.u32 %s218, 4
          %s228 = int_to_ptr.vmem [resolvable:$true] %s227
          %230 = dma.hbm_to_vmem [thread:$0]  %s226, 32, %s228, %s215
        $region32: #{tpu_custom_call.1} parent=23 // pred_fallthru
          _
      $region24: #{tpu_custom_call.1} parent=5 // pred_fallthru
        _
      %p231 = scmp.le.s32.totalorder 1, %s19
      %p232 = scmp.lt.s32.totalorder %s19, 3
      %p233 = pnand %p231, %p232
      %p234 = pneg %p233
      // Predicated region
      $region33: #{tpu_custom_call.1} parent=5 // pred_check
        _
      $region34: #{tpu_custom_call.1} parent=5 // pred_check_branch
        %236 = sbr.rel (%p233) target = $region36
      $region35: #{tpu_custom_call.1} parent=5 // pred_region
        %s237 = ssub.s32 %s19, 1
        %s238 = sand.u32 %s46, 1
        %s239 = scalar_lea.sflag [#allocation3], %s238
        %s240 = sand.u32 %s46, 1
        %s241 = smul.addr %s240, 8
        %s242 = scalar_lea.vmem [#allocation2], %s241
        // Predicated region
        $region37: #{tpu_custom_call.1} parent=35 // pred_check
          %p243 = pneg %p59
        $region38: #{tpu_custom_call.1} parent=35 // pred_check_branch
          %245 = sbr.rel (%p243) target = $region40
        $region39: #{tpu_custom_call.1} parent=35 // pred_region
          %247 = dma.done %s239, 128
        $region40: #{tpu_custom_call.1} parent=35 // pred_fallthru
          _
        %s248 = sand.u32 %s24, 1
        %s249 = scalar_lea.sflag [#allocation6], %s248
        %s250 = sand.u32 %s74, 1
        %s251 = smul.addr %s250, 2
        %s252 = scalar_lea.vmem [#allocation5], %s251
        // Predicated region
        $region41: #{tpu_custom_call.1} parent=35 // pred_check
          %p253 = pneg %p87
        $region42: #{tpu_custom_call.1} parent=35 // pred_check_branch
          %255 = sbr.rel (%p253) target = $region44
        $region43: #{tpu_custom_call.1} parent=35 // pred_region
          %257 = dma.done %s249, 32
        $region44: #{tpu_custom_call.1} parent=35 // pred_fallthru
          _
        // Predicated region
        $region45: #{tpu_custom_call.1} parent=35 // pred_check
          %p258 = pneg %p108
        $region46: #{tpu_custom_call.1} parent=35 // pred_check_branch
          %260 = sbr.rel (%p258) target = $region48
        $region47: #{tpu_custom_call.1} parent=35 // pred_region
          %262 = dma.done [#allocation6], 128
        $region48: #{tpu_custom_call.1} parent=35 // pred_fallthru
          _
        %s263 = sand.u32 %s46, 1
        %s264 = scalar_lea.sflag [#allocation3], %s263
        %s265 = sand.u32 %s46, 1
        %s266 = smul.addr %s265, 8
        %s267 = scalar_lea.vmem [#allocation2], %s266
        %p268 = pneg %p59
        %p269 = pneg %p56
        %s270 = sand.u32 %s24, 1
        %s271 = scalar_lea.sflag [#allocation6], %s270
        %s272 = sand.u32 %s74, 1
        %s273 = smul.addr %s272, 2
        %s274 = scalar_lea.vmem [#allocation5], %s273
        %p275 = pneg %p87
        %p276 = pneg %p84
        %p277 = pneg %p108
        %p278 = pneg %p105
        %p279 = pneg %p129
        %p280 = pneg %p126
        %p281 = pneg %p157
        %p282 = pneg %p154
        %s283 = sand.u32 %s144, 1
        %s284 = scalar_lea.sflag [#allocation4], %s283
        %s285 = sand.u32 %s144, 1
        %s286 = smul.addr %s285, 8
        %s287 = scalar_lea.vmem [#allocation8], %s286
        %v288 = vld [vmem:[#allocation7] sm:$0xff]
        %v289 = vld [vmem:[%s3] sm:$0x1]
        %v290 = vlaneseq
        %v291 = vshrl.u32 %v290, 7
        %v292 = vadd.s32 %v291, 8
        %v293 = vld [vmem:[%s242] sm:$0xff]
        %294 = vxpose.xlu0.b32.start [1/16] %v293, 128
        %295 = vxpose.xlu0.b32.cont [2/16] 0.0, 128
        %296 = vxpose.xlu0.b32.cont [3/16] 0.0, 128
        %297 = vxpose.xlu0.b32.cont [4/16] 0.0, 128
        %298 = vxpose.xlu0.b32.cont [5/16] 0.0, 128
        %299 = vxpose.xlu0.b32.cont [6/16] 0.0, 128
        %300 = vxpose.xlu0.b32.cont [7/16] 0.0, 128
        %301 = vxpose.xlu0.b32.cont [8/16] 0.0, 128
        %302 = vxpose.xlu0.b32.cont [9/16] 0.0, 128
        %303 = vxpose.xlu0.b32.cont [10/16] 0.0, 128
        %304 = vxpose.xlu0.b32.cont [11/16] 0.0, 128
        %305 = vxpose.xlu0.b32.cont [12/16] 0.0, 128
        %306 = vxpose.xlu0.b32.cont [13/16] 0.0, 128
        %307 = vxpose.xlu0.b32.cont [14/16] 0.0, 128
        %308 = vxpose.xlu0.b32.cont [15/16] 0.0, 128
        %309 = vxpose.xlu0.b32.end [16/16] 0.0, 128
        %v310 = vpop.trf.xlu0
        %v311 = vpop.trf.xlu0
        %v312 = vpop.trf.xlu0
        %v313 = vpop.trf.xlu0
        %v314 = vpop.trf.xlu0
        %v315 = vpop.trf.xlu0
        %v316 = vpop.trf.xlu0
        %v317 = vpop.trf.xlu0
        %v318 = vpop.trf.xlu0
        %v319 = vpop.trf.xlu0
        %v320 = vpop.trf.xlu0
        %v321 = vpop.trf.xlu0
        %v322 = vpop.trf.xlu0
        %v323 = vpop.trf.xlu0
        %v324 = vpop.trf.xlu0
        %v325 = vpop.trf.xlu0
        %vm326 = vcmask 64512
        %v328 = vsel %vm326, %v310, 0
        %v331 = vsel %vm326, %v311, 0
        %333 = vmatpush.msra.mxu0 0.0
        %334 = vmatpush.msra.mxu0 0.0
        %335 = vmatpush.msra.mxu0 0.0
        %336 = vmatpush.msra.mxu0 0.0
        %337 = vmatpush.msra.mxu0 0.0
        %338 = vmatpush.msra.mxu0 0.0
        %339 = vmatpush.msra.mxu0 0.0
        %340 = vmatpush.msra.mxu0 0.0
        %341 = vmatpush.msra.mxu0 0.0
        %342 = vmatpush.msra.mxu0 0.0
        %343 = vmatpush.msra.mxu0 0.0
        %344 = vmatpush.msra.mxu0 0.0
        %345 = vmatpush.msra.mxu0 0.0
        %346 = vmatpush.msra.mxu0 0.0
        %347 = vmatpush.msra.mxu0 0.0
        %348 = vmatpush.msra.mxu0 %v288
        %349 = vmatmul.f32.gmra.mxu0 %v328
        %v350 = vpop.f32.mrf.mxu0
        %v351 = vadd.f32 0.0, %v350
        %352 = vmatmul.f32.gmra.mxu0 %v331
        %v353 = vpop.f32.mrf.mxu0
        %v354 = vadd.f32 0.0, %v353
        %355 = vdwg.mxu0
        %v356 = vld [vmem:[%s252] sm:$0x1]
        %v357 = vld [vmem:[%s252 + $0x1] sm:$0x1]
        %vm358 = vcmp.eq.s32.totalorder %v291, 0
        %vm359 = vcmp.eq.s32.totalorder %v292, 0
        %362 = vrot.lane.b32.xlu0 %v351, 104
        %v363 = vpop.permute.xlu0 %362
        %364 = vrot.lane.b32.xlu0 %v354, 104
        %v365 = vpop.permute.xlu0 %364
        %v368 = vrot.slane %v363, 7
        %v369 = vrot.slane %v365, 7
        %vm370 = vcmp.lt.s32.totalorder %v291, 1
        %v371 = vsel %vm370, %v368, %v369
        %v372 = vsel %vm370, %v369, %v368
        %v373 = vsel %vm358, 1, 0
        %v374 = vsel %vm359, 1, 0
        %vm375 = vcmp.eq.s32.totalorder %v373, 1
        %vm376 = vcmp.eq.s32.totalorder %v374, 1
        %v377 = vperm.slane %v356, 0
        %v378 = vsel %vm375, %v377, %v372
        %v379 = vsel %vm376, %v377, %v371
        %vm380 = vcmp.eq.s32.totalorder %v291, 15
        %vm381 = vcmp.eq.s32.totalorder %v292, 15
        %v382 = vrot.slane %v351, 1
        %v383 = vrot.slane %v354, 1
        %vm384 = vcmp.lt.s32.totalorder %v291, 7
        %v385 = vsel %vm384, %v382, %v383
        %v386 = vsel %vm384, %v383, %v382
        %v387 = vsel %vm380, 1, 0
        %v388 = vsel %vm381, 1, 0
        %vm389 = vcmp.eq.s32.totalorder %v387, 1
        %vm390 = vcmp.eq.s32.totalorder %v388, 1
        %v391 = vperm.slane %v357, 0
        %v392 = vsel %vm389, %v391, %v385
        %v393 = vsel %vm390, %v391, %v386
        %396 = vrot.lane.b32.xlu0 %v378, 8
        %v397 = vpop.permute.xlu0 %396
        %398 = vrot.lane.b32.xlu0 %v379, 8
        %v399 = vpop.permute.xlu0 %398
        %v402 = vadd.f32 %v351, %v397
        %v403 = vadd.f32 %v354, %v399
        %v405 = vperm.slane %v289, 0
        %406 = vrot.lane.b32.xlu0 %v405, 8
        %v407 = vpop.permute.xlu0 %406
        %v409 = vadd.f32 %v402, %v407
        %v410 = vadd.f32 %v403, %v407
        %413 = vrot.lane.b32.xlu0 %v392, 16
        %v414 = vpop.permute.xlu0 %413
        %415 = vrot.lane.b32.xlu0 %v393, 16
        %v416 = vpop.permute.xlu0 %415
        %v419 = vadd.f32 %v351, %v414
        %v420 = vadd.f32 %v354, %v416
        %421 = vrot.lane.b32.xlu0 %v405, 16
        %v422 = vpop.permute.xlu0 %421
        %v424 = vadd.f32 %v419, %v422
        %v425 = vadd.f32 %v420, %v422
        %v428 = vrot.slane %v409, 1
        %v429 = vrot.slane %v409, 2
        %v430 = vrot.slane %v409, 3
        %v431 = vrot.slane %v409, 4
        %v432 = vrot.slane %v409, 5
        %v433 = vrot.slane %v409, 6
        %v434 = vrot.slane %v409, 7
        %v435 = vrot.slane %v410, 1
        %v436 = vrot.slane %v410, 2
        %v437 = vrot.slane %v410, 3
        %v438 = vrot.slane %v410, 4
        %v439 = vrot.slane %v410, 5
        %v440 = vrot.slane %v410, 6
        %v441 = vrot.slane %v410, 7
        %v458 = vrot.slane %v424, 1
        %v459 = vrot.slane %v424, 2
        %v460 = vrot.slane %v424, 3
        %v461 = vrot.slane %v424, 4
        %v462 = vrot.slane %v424, 5
        %v463 = vrot.slane %v424, 6
        %v464 = vrot.slane %v424, 7
        %v465 = vrot.slane %v425, 1
        %v466 = vrot.slane %v425, 2
        %v467 = vrot.slane %v425, 3
        %v468 = vrot.slane %v425, 4
        %v469 = vrot.slane %v425, 5
        %v470 = vrot.slane %v425, 6
        %v471 = vrot.slane %v425, 7
        %v472 = vperm.slane %v424, 0
        %v473 = vperm.slane %v458, 0
        %v474 = vperm.slane %v459, 0
        %v475 = vperm.slane %v460, 0
        %v476 = vperm.slane %v461, 0
        %v477 = vperm.slane %v462, 0
        %v478 = vperm.slane %v463, 0
        %v479 = vperm.slane %v464, 0
        %v480 = vperm.slane %v425, 0
        %v481 = vperm.slane %v465, 0
        %v482 = vperm.slane %v466, 0
        %v483 = vperm.slane %v467, 0
        %v484 = vperm.slane %v468, 0
        %v485 = vperm.slane %v469, 0
        %v486 = vperm.slane %v470, 0
        %v487 = vperm.slane %v471, 0
        %488 = vrot.lane.b32.xlu0 %v472, 120
        %v489 = vpop.permute.xlu0 %488
        %490 = vrot.lane.b32.xlu0 %v473, 120
        %v491 = vpop.permute.xlu0 %490
        %492 = vrot.lane.b32.xlu0 %v474, 120
        %v493 = vpop.permute.xlu0 %492
        %494 = vrot.lane.b32.xlu0 %v475, 120
        %v495 = vpop.permute.xlu0 %494
        %496 = vrot.lane.b32.xlu0 %v476, 120
        %v497 = vpop.permute.xlu0 %496
        %498 = vrot.lane.b32.xlu0 %v477, 120
        %v499 = vpop.permute.xlu0 %498
        %500 = vrot.lane.b32.xlu0 %v478, 120
        %v501 = vpop.permute.xlu0 %500
        %502 = vrot.lane.b32.xlu0 %v479, 120
        %v503 = vpop.permute.xlu0 %502
        %504 = vrot.lane.b32.xlu0 %v480, 120
        %v505 = vpop.permute.xlu0 %504
        %506 = vrot.lane.b32.xlu0 %v481, 120
        %v507 = vpop.permute.xlu0 %506
        %508 = vrot.lane.b32.xlu0 %v482, 120
        %v509 = vpop.permute.xlu0 %508
        %510 = vrot.lane.b32.xlu0 %v483, 120
        %v511 = vpop.permute.xlu0 %510
        %512 = vrot.lane.b32.xlu0 %v484, 120
        %v513 = vpop.permute.xlu0 %512
        %514 = vrot.lane.b32.xlu0 %v485, 120
        %v515 = vpop.permute.xlu0 %514
        %516 = vrot.lane.b32.xlu0 %v486, 120
        %v517 = vpop.permute.xlu0 %516
        %518 = vrot.lane.b32.xlu0 %v487, 120
        %v519 = vpop.permute.xlu0 %518
        %vm536 = vcmask 1040384
        %v537 = vsel %vm536, %v409, %v489
        %v538 = vsel %vm536, %v428, %v491
        %v539 = vsel %vm536, %v429, %v493
        %v540 = vsel %vm536, %v430, %v495
        %v541 = vsel %vm536, %v431, %v497
        %v542 = vsel %vm536, %v432, %v499
        %v543 = vsel %vm536, %v433, %v501
        %v544 = vsel %vm536, %v434, %v503
        %v545 = vsel %vm536, %v410, %v505
        %v546 = vsel %vm536, %v435, %v507
        %v547 = vsel %vm536, %v436, %v509
        %v548 = vsel %vm536, %v437, %v511
        %v549 = vsel %vm536, %v438, %v513
        %v550 = vsel %vm536, %v439, %v515
        %v551 = vsel %vm536, %v440, %v517
        %v552 = vsel %vm536, %v441, %v519
        %569 = vst [vmem:[#allocation1] ss:$4 sm:$0xff] %v537
        %s570 = scalar_lea.vmem [#allocation1], 1
        %571 = vst [vmem:[%s570] ss:$4 sm:$0xff] %v538
        %s572 = scalar_lea.vmem [#allocation1], 2
        %573 = vst [vmem:[%s572] ss:$4 sm:$0xff] %v539
        %s574 = scalar_lea.vmem [#allocation1], 3
        %575 = vst [vmem:[%s574] ss:$4 sm:$0xff] %v540
        %s576 = scalar_lea.vmem [#allocation1], 32
        %577 = vst [vmem:[%s576] ss:$4 sm:$0xff] %v541
        %s578 = scalar_lea.vmem [#allocation1], 33
        %579 = vst [vmem:[%s578] ss:$4 sm:$0xff] %v542
        %s580 = scalar_lea.vmem [#allocation1], 34
        %581 = vst [vmem:[%s580] ss:$4 sm:$0xff] %v543
        %s582 = scalar_lea.vmem [#allocation1], 35
        %583 = vst [vmem:[%s582] ss:$4 sm:$0xff] %v544
        %v584 = vld.sshfl [vmem:[#allocation1] sm:$0xff pattern:$0x73625140]
        %v585 = vld.sshfl [vmem:[#allocation1 + $0x20] sm:$0xff pattern:$0x73625140]
        %586 = vst [vmem:[#allocation1] ss:$4 sm:$0xff] %v545
        %587 = vst [vmem:[%s570] ss:$4 sm:$0xff] %v546
        %588 = vst [vmem:[%s572] ss:$4 sm:$0xff] %v547
        %589 = vst [vmem:[%s574] ss:$4 sm:$0xff] %v548
        %590 = vst [vmem:[%s576] ss:$4 sm:$0xff] %v549
        %591 = vst [vmem:[%s578] ss:$4 sm:$0xff] %v550
        %592 = vst [vmem:[%s580] ss:$4 sm:$0xff] %v551
        %593 = vst [vmem:[%s582] ss:$4 sm:$0xff] %v552
        %v594 = vld.sshfl [vmem:[#allocation1] sm:$0xff pattern:$0x73625140]
        %v595 = vld.sshfl [vmem:[#allocation1 + $0x20] sm:$0xff pattern:$0x73625140]
        %596 = vrot.lane.b32.xlu0 %v584, 120
        %v597 = vpop.permute.xlu0 %596
        %598 = vrot.lane.b32.xlu0 %v585, 120
        %v599 = vpop.permute.xlu0 %598
        %600 = vrot.lane.b32.xlu0 %v594, 120
        %v601 = vpop.permute.xlu0 %600
        %602 = vrot.lane.b32.xlu0 %v595, 120
        %v603 = vpop.permute.xlu0 %602
        %608 = vxpose.xlu0.b32.start [1/16] %v597, 128
        %609 = vxpose.xlu0.b32.cont [2/16] %v599, 128
        %610 = vxpose.xlu0.b32.cont [3/16] %v601, 128
        %611 = vxpose.xlu0.b32.cont [4/16] %v603, 128
        %612 = vxpose.xlu0.b32.cont [5/16] 0.0, 128
        %613 = vxpose.xlu0.b32.cont [6/16] 0.0, 128
        %614 = vxpose.xlu0.b32.cont [7/16] 0.0, 128
        %615 = vxpose.xlu0.b32.cont [8/16] 0.0, 128
        %616 = vxpose.xlu0.b32.cont [9/16] 0.0, 128
        %617 = vxpose.xlu0.b32.cont [10/16] 0.0, 128
        %618 = vxpose.xlu0.b32.cont [11/16] 0.0, 128
        %619 = vxpose.xlu0.b32.cont [12/16] 0.0, 128
        %620 = vxpose.xlu0.b32.cont [13/16] 0.0, 128
        %621 = vxpose.xlu0.b32.cont [14/16] 0.0, 128
        %622 = vxpose.xlu0.b32.cont [15/16] 0.0, 128
        %623 = vxpose.xlu0.b32.end [16/16] 0.0, 128
        %v624 = vpop.trf.xlu0
        %v625 = vpop.trf.xlu0
        %v626 = vpop.trf.xlu0
        %v627 = vpop.trf.xlu0
        %v628 = vpop.trf.xlu0
        %v629 = vpop.trf.xlu0
        %v630 = vpop.trf.xlu0
        %v631 = vpop.trf.xlu0
        %v632 = vpop.trf.xlu0
        %v633 = vpop.trf.xlu0
        %v634 = vpop.trf.xlu0
        %v635 = vpop.trf.xlu0
        %v636 = vpop.trf.xlu0
        %v637 = vpop.trf.xlu0
        %v638 = vpop.trf.xlu0
        %v639 = vpop.trf.xlu0
        %vm640 = vcmask 261120
        %641 = vst.msk [vmem:[%s287] sm:$0xff] %vm640, %v624
        %s642 = sand.u32 %s144, 1
        %s643 = scalar_lea.sflag [#allocation4], %s642
        %s644 = sand.u32 %s144, 1
        %s645 = smul.addr %s644, 8
        %s646 = scalar_lea.vmem [#allocation8], %s645
        // Predicated region
        $region49: #{tpu_custom_call.1} parent=35 // pred_check
          %p647 = pneg %p154
        $region50: #{tpu_custom_call.1} parent=35 // pred_check_branch
          %649 = sbr.rel (%p647) target = $region52
        $region51: #{tpu_custom_call.1} parent=35 // pred_region
          %651 = vsyncadd %s643, 0
          %s652 = sadd.s32 %s29, %s28
          %s653 = smul.addr %s652, 8
          %s654 = scalar_lea.hbm %s4, %s653
          %s656 = sshll.u32 %s646, 4
          %s657 = int_to_ptr.vmem [resolvable:$true] %s656
          %s658 = sshll.u32 %s654, 4
          %s659 = int_to_ptr.hbm [resolvable:$true] %s658
          %661 = dma.vmem_to_hbm [thread:$0]  %s657, 128, %s659, %s643
        $region52: #{tpu_custom_call.1} parent=35 // pred_fallthru
          _
      $region36: #{tpu_custom_call.1} parent=5 // pred_fallthru
        _
      %p662 = scmp.le.s32.totalorder 2, %s19
      // Predicated region
      $region53: #{tpu_custom_call.1} parent=5 // pred_check
        %p663 = pneg %p662
      $region54: #{tpu_custom_call.1} parent=5 // pred_check_branch
        %665 = sbr.rel (%p663) target = $region56
      $region55: #{tpu_custom_call.1} parent=5 // pred_region
        %s666 = ssub.s32 %s19, 2
        // Predicated region
        $region57: #{tpu_custom_call.1} parent=55 // pred_check
          %p667 = pneg %p160
        $region58: #{tpu_custom_call.1} parent=55 // pred_check_branch
          %669 = sbr.rel (%p667) target = $region60
        $region59: #{tpu_custom_call.1} parent=55 // pred_region
          %s670 = sand.u32 %s145, 1
          %s671 = scalar_lea.sflag [#allocation4], %s670
          %s672 = sand.u32 %s145, 1
          %s673 = smul.addr %s672, 8
          %s674 = scalar_lea.vmem [#allocation8], %s673
          %676 = dma.done %s671, 128
        $region60: #{tpu_custom_call.1} parent=55 // pred_fallthru
          _
      $region56: #{tpu_custom_call.1} parent=5 // pred_fallthru
        _
    $region6: #{tpu_custom_call.1} parent=1 // loop_footer
      %s23 = sadd.s32 1, %s19
    $region7: #{tpu_custom_call.1} parent=1 // loop_footer_branch
      %18 = sbr.rel target = $region3
    $region8: #{tpu_custom_call.1} parent=1 // loop_exit
      _
    %677 = vsyncpa [#allocation3], 1
    %s678 = scalar_lea.sflag [#allocation3], 1
    %679 = vsyncpa %s678, 1
    %680 = vsyncpa [#allocation6], 1
    %s681 = scalar_lea.sflag [#allocation6], 1
    %682 = vsyncpa %s681, 1
    %683 = vsyncpa [#allocation4], 1
    %s684 = scalar_lea.sflag [#allocation4], 1
    %685 = vsyncpa %s684, 1

</llo_original>
